<compile_context>
chip_gen: v7x
topology: tpu7x:2x2x1
jax: 0.10.0
libtpu: 0.0.40
codegen_flags: <defaults>
</compile_context>

<pallas_src>
import functools

import jax
import jax.numpy as jnp
from jax.experimental import pallas as pl
from jax.experimental.pallas import tpu as pltpu

K = 3            # conv kernel size (fixed by the module)
NEG_SLOPE = 0.2  # LeakyReLU slope


def _round_up(x, m):
    return ((x + m - 1) // m) * m


def _conv_block_kernel(x_ref, m_ref, w_ref, o_ref, xp_ref, taps_ref, *, W, OFF):
    # x_ref   : (1, Cin, H*W)        input image, spatial flattened on the lane axis
    # m_ref   : (2, H*W)  f32        row 0: not-left-wrap mask, row 1: not-right-wrap mask
    # w_ref   : (Cout_t, 9*Cin+1)    repacked weights, tap-major, bias as last column
    # o_ref   : (1, Cout_t, H*W)     lane-dense output block
    # xp_ref  : (Cin, Ls)  f32       zero-halo flat line (image at 128-aligned offset OFF)
    # taps_ref: (9*Cin+1, H*W) cdt   im2col tap matrix; last row = ones (bias row)
    _, Cin, HW = x_ref.shape
    KC = K * K * Cin
    Ls = xp_ref.shape[1]

    # Zero ONLY the halos; the image region is overwritten right after.  Re-done
    # every step so it stays correct under megacore grid splitting.
    xp_ref[:, pl.ds(0, OFF)] = jnp.zeros((Cin, OFF), xp_ref.dtype)
    xp_ref[:, pl.ds(OFF + HW, Ls - OFF - HW)] = jnp.zeros(
        (Cin, Ls - OFF - HW), xp_ref.dtype)
    xp_ref[:, pl.ds(OFF, HW)] = x_ref[0].astype(xp_ref.dtype)   # dense, 128-aligned store

    # Precomputed wrap masks; broadcasts hoisted out of the (unrolled) tap loop.
    not_left = jnp.broadcast_to(m_ref[0:1, :], (Cin, HW))
    not_right = jnp.broadcast_to(m_ref[1:2, :], (Cin, HW))

    # im2col: 9 statically shifted slices of the halo line -> tap-major scratch.
    for kh in range(K):
        for kw in range(K):
            t = kh * K + kw
            start = OFF + (kh - 1) * W + (kw - 1)     # static Python int
            xs = xp_ref[:, pl.ds(start, HW)]          # (Cin, H*W) shifted view (f32)
            if kw == 0:
                xs = xs * not_left                    # kill prev-row last-elem wrap
            elif kw == 2:
                xs = xs * not_right                   # kill next-row first-elem wrap
            taps_ref[pl.ds(t * Cin, Cin), :] = xs.astype(taps_ref.dtype)
    taps_ref[pl.ds(KC, 1), :] = jnp.ones((1, HW), taps_ref.dtype)   # bias ones-row

    # One fused MXU matmul (contraction K = 9*Cin + 1), f32 accumulation,
    # then the LeakyReLU epilogue in f32.
    acc = jnp.dot(w_ref[...], taps_ref[...], preferred_element_type=jnp.float32)
    o_ref[0] = jnp.where(acc >= 0, acc, NEG_SLOPE * acc).astype(o_ref.dtype)


def conv_block(x_nchw, w_oihw, b, *, compute_dtype=None, cout_tile=None):
    """ConvBlock forward: Conv2d(3x3, stride=1, pad=1) + LeakyReLU(0.2).

    x_nchw: (N, Cin, H, W); w_oihw: (Cout, Cin, 3, 3); b: (Cout,).
    compute_dtype: dtype of the MXU operands (e.g. jnp.bfloat16); accumulation
      and the LeakyReLU epilogue stay f32; output keeps x's dtype.
    cout_tile: optional Cout tile (must divide Cout). With cout_tile < Cout the
      grid gets a second "parallel" axis (feeds both v7x TensorCores even at
      N == 1), at the cost of rebuilding the tap scratch per Cout tile.
    """
    N, Cin, H, W = x_nchw.shape
    Cout = w_oihw.shape[0]
    HW = H * W
    KC = K * K * Cin
    cdt = jnp.dtype(x_nchw.dtype) if compute_dtype is None else jnp.dtype(compute_dtype)

    if cout_tile is None:
        cout_tile = Cout
    assert Cout % cout_tile == 0, (Cout, cout_tile)
    n_co = Cout // cout_tile

    # Free reshape of x (no transpose, no HBM pad round-trip).
    x_flat = x_nchw.reshape(N, Cin, HW)

    # One-time weight repack: tap-major columns [(kh*3+kw)*Cin + ci], bias folded
    # as the last column (paired with the tap matrix's constant ones-row).
    w_flat = jnp.transpose(w_oihw, (0, 2, 3, 1)).reshape(Cout, KC)
    wb = jnp.concatenate([w_flat, b.reshape(Cout, 1)], axis=1).astype(cdt)

    # Host-precomputed wrap masks (a horizontal shift of the row-major flat line
    # wraps the adjacent row's edge element into w==0 / w==W-1).
    col = jnp.arange(HW, dtype=jnp.int32) % W
    masks = jnp.stack([col != 0, col != W - 1]).astype(jnp.float32)   # (2, HW)

    OFF = _round_up(W + 1, 128)               # 128-aligned image offset in the flat line
    Ls = OFF + HW + _round_up(W + 1, 128)     # leading halo | image | trailing halo

    # Explicit scoped-VMEM budget (defaults: 16 MiB v5e / 32 MiB v6e & v7x).
    def _bytes(n_elems, dt):
        return n_elems * jnp.dtype(dt).itemsize

    est = (2 * _bytes(Cin * HW, x_nchw.dtype)           # double-buffered x block
           + 2 * _bytes(cout_tile * HW, x_nchw.dtype)   # double-buffered out block
           + 2 * _bytes(2 * HW, jnp.float32)            # resident masks
           + 2 * _bytes(cout_tile * (KC + 1), cdt)      # resident weight tile
           + _bytes(Cin * Ls, jnp.float32)              # halo-line scratch
           + _bytes((KC + 1) * HW, cdt))                # tap-matrix scratch
    vmem_limit = int(min(max(2 * est, 16 << 20), 64 << 20))   # cap at v7x physical

    kernel = functools.partial(_conv_block_kernel, W=W, OFF=OFF)

    out_flat = pl.pallas_call(
        kernel,
        out_shape=jax.ShapeDtypeStruct((N, Cout, HW), x_nchw.dtype),
        grid_spec=pltpu.PrefetchScalarGridSpec(
            num_scalar_prefetch=0,
            grid=(N, n_co),
            in_specs=[
                pl.BlockSpec((1, Cin, HW), lambda n, co: (n, 0, 0)),
                pl.BlockSpec((2, HW), lambda n, co: (0, 0)),               # resident masks
                pl.BlockSpec((cout_tile, KC + 1), lambda n, co: (co, 0)),  # weight tile
            ],
            out_specs=pl.BlockSpec((1, cout_tile, HW), lambda n, co: (n, co, 0)),
            scratch_shapes=[
                pltpu.VMEM((Cin, Ls), jnp.float32),    # zero-halo flat line (f32 VALU path)
                pltpu.VMEM((KC + 1, HW), cdt),         # im2col taps (+ bias ones-row)
            ],
        ),
        compiler_params=pltpu.CompilerParams(
            dimension_semantics=("parallel", "parallel"),
            vmem_limit_bytes=vmem_limit,
        ),
    )(x_flat, masks, wb)

    return out_flat.reshape(N, Cout, H, W)


def conv_block_ref(x_nchw, w_oihw, b):
    """Pure-JAX reference (matches PyTorch Conv2d(3, stride=1, pad=1) + LeakyReLU(0.2))."""
    y = jax.lax.conv_general_dilated(
        x_nchw, w_oihw, window_strides=(1, 1), padding="SAME",
        dimension_numbers=("NCHW", "OIHW", "NCHW"))
    y = y + b[None, :, None, None]
    return jnp.where(y >= 0, y, NEG_SLOPE * y)


if __name__ == "__main__":
    # ConvBlock(ndims=2, in_channels=4, out_channels=8, stride=1)
    N, Cin, Cout, H, W = 2, 4, 8, 16, 16

    key = jax.random.PRNGKey(0)
    kx, kw1, kb1, kw2, kb2 = jax.random.split(key, 5)
    x = jax.random.normal(kx, (N, Cin, H, W), dtype=jnp.float32)
    weight = jax.random.normal(kw1, (Cout, Cin, K, K), dtype=jnp.float32) * 0.1
    bias = jax.random.normal(kb1, (Cout,), dtype=jnp.float32) * 0.1

    ref = jax.block_until_ready(conv_block_ref(x, weight, bias))

    # f32 path: tight correctness check.
    out = jax.block_until_ready(conv_block(x, weight, bias))
    assert out.shape == (N, Cout, H, W), out.shape
    assert jnp.allclose(out, ref, atol=1e-4, rtol=1e-4), float(jnp.max(jnp.abs(out - ref)))

    # bf16 MXU-operand path (f32 accumulation / epilogue): loose check.
    out_bf16 = jax.block_until_ready(
        conv_block(x, weight, bias, compute_dtype=jnp.bfloat16))
    assert jnp.allclose(out_bf16, ref, atol=1e-1, rtol=1e-1), \
        float(jnp.max(jnp.abs(out_bf16 - ref)))

    # Cout-tiled path: exercises the second "parallel" grid axis (v7x megacore).
    Cout2 = 16
    weight2 = jax.random.normal(kw2, (Cout2, Cin, K, K), dtype=jnp.float32) * 0.1
    bias2 = jax.random.normal(kb2, (Cout2,), dtype=jnp.float32) * 0.1
    ref2 = jax.block_until_ready(conv_block_ref(x, weight2, bias2))
    out2 = jax.block_until_ready(conv_block(x, weight2, bias2, cout_tile=8))
    assert jnp.allclose(out2, ref2, atol=1e-4, rtol=1e-4), \
        float(jnp.max(jnp.abs(out2 - ref2)))

    print("KERNEL_OK")
</pallas_src>

<mosaic_0001>
module attributes {stable_mosaic.version = 11 : i64} {
  func.func @_conv_block_kernel(%arg0: i32, %arg1: i32, %arg2: memref<1x4x256xf32, #tpu.memory_space<vmem>>, %arg3: memref<2x256xf32, #tpu.memory_space<vmem>>, %arg4: memref<8x37xf32, #tpu.memory_space<vmem>>, %arg5: memref<1x8x256xf32, #tpu.memory_space<vmem>>, %arg6: memref<4x512xf32, #tpu.memory_space<vmem>>, %arg7: memref<37x256xf32, #tpu.memory_space<vmem>>) attributes {dimension_semantics = [#tpu.dimension_semantics<parallel>, #tpu.dimension_semantics<parallel>], iteration_bounds = array<i64: 2, 1>, scalar_prefetch = 0 : i64, scratch_operands = 2 : i64, tpu.core_type = #tpu.core_type<tc>, window_params = [{transform_indices = @transform_0, window_bounds = array<i64: 1, 4, 256>}, {pipeline_mode = #tpu.pipeline_mode<synchronous>, transform_indices = @transform_1, window_bounds = array<i64: 2, 256>}, {transform_indices = @transform_2, window_bounds = array<i64: 8, 37>}, {transform_indices = @transform_3, window_bounds = array<i64: 1, 8, 256>}]} {
    %cst = arith.constant 0.000000e+00 : f32
    %0 = vector.broadcast %cst : f32 to vector<4x128xf32>
    %c0 = arith.constant 0 : index
    %c0_0 = arith.constant 0 : index
    %1 = vector.load %arg6[%c0, %c0_0] : memref<4x512xf32, #tpu.memory_space<vmem>>, vector<4x128xf32>
    tpu.vector_store %arg6[%c0, %c0_0], %0 {strides = array<i32>} : memref<4x512xf32, #tpu.memory_space<vmem>>, vector<4x128xf32>,
    %cst_1 = arith.constant 0.000000e+00 : f32
    %2 = vector.broadcast %cst_1 : f32 to vector<4x128xf32>
    %c0_2 = arith.constant 0 : index
    %c384 = arith.constant 384 : index
    %3 = vector.load %arg6[%c0_2, %c384] : memref<4x512xf32, #tpu.memory_space<vmem>>, vector<4x128xf32>
    tpu.vector_store %arg6[%c0_2, %c384], %2 {strides = array<i32>} : memref<4x512xf32, #tpu.memory_space<vmem>>, vector<4x128xf32>,
    %c0_3 = arith.constant 0 : index
    %c0_4 = arith.constant 0 : index
    %c0_5 = arith.constant 0 : index
    %4 = vector.load %arg2[%c0_3, %c0_4, %c0_5] : memref<1x4x256xf32, #tpu.memory_space<vmem>>, vector<1x4x256xf32>
    %5 = vector.shape_cast %4 : vector<1x4x256xf32> to vector<4x256xf32>
    %c0_6 = arith.constant 0 : index
    %c128 = arith.constant 128 : index
    %6 = vector.load %arg6[%c0_6, %c128] : memref<4x512xf32, #tpu.memory_space<vmem>>, vector<4x256xf32>
    tpu.vector_store %arg6[%c0_6, %c128], %5 {strides = array<i32>} : memref<4x512xf32, #tpu.memory_space<vmem>>, vector<4x256xf32>,
    %c0_7 = arith.constant 0 : index
    %c0_8 = arith.constant 0 : index
    %7 = vector.load %arg3[%c0_7, %c0_8] : memref<2x256xf32, #tpu.memory_space<vmem>>, vector<1x256xf32>
    %8 = vector.shape_cast %7 : vector<1x256xf32> to vector<1x256xf32>
    %9 = vector.broadcast %8 : vector<1x256xf32> to vector<4x256xf32>
    %c1 = arith.constant 1 : index
    %c0_9 = arith.constant 0 : index
    %10 = vector.load %arg3[%c1, %c0_9] : memref<2x256xf32, #tpu.memory_space<vmem>>, vector<1x256xf32>
    %11 = vector.shape_cast %10 : vector<1x256xf32> to vector<1x256xf32>
    %12 = vector.broadcast %11 : vector<1x256xf32> to vector<4x256xf32>
    %c0_10 = arith.constant 0 : index
    %c111 = arith.constant 111 : index
    %13 = vector.load %arg6[%c0_10, %c111] : memref<4x512xf32, #tpu.memory_space<vmem>>, vector<4x256xf32>
    %14 = arith.mulf %13, %9 : vector<4x256xf32>
    %c0_11 = arith.constant 0 : index
    %c0_12 = arith.constant 0 : index
    %15 = vector.load %arg7[%c0_11, %c0_12] : memref<37x256xf32, #tpu.memory_space<vmem>>, vector<4x256xf32>
    tpu.vector_store %arg7[%c0_11, %c0_12], %14 {strides = array<i32>} : memref<37x256xf32, #tpu.memory_space<vmem>>, vector<4x256xf32>,
    %c0_13 = arith.constant 0 : index
    %c112 = arith.constant 112 : index
    %16 = vector.load %arg6[%c0_13, %c112] : memref<4x512xf32, #tpu.memory_space<vmem>>, vector<4x256xf32>
    %c4 = arith.constant 4 : index
    %c0_14 = arith.constant 0 : index
    %17 = vector.load %arg7[%c4, %c0_14] : memref<37x256xf32, #tpu.memory_space<vmem>>, vector<4x256xf32>
    tpu.vector_store %arg7[%c4, %c0_14], %16 {strides = array<i32>} : memref<37x256xf32, #tpu.memory_space<vmem>>, vector<4x256xf32>,
    %c0_15 = arith.constant 0 : index
    %c113 = arith.constant 113 : index
    %18 = vector.load %arg6[%c0_15, %c113] : memref<4x512xf32, #tpu.memory_space<vmem>>, vector<4x256xf32>
    %19 = arith.mulf %18, %12 : vector<4x256xf32>
    %c8 = arith.constant 8 : index
    %c0_16 = arith.constant 0 : index
    %20 = vector.load %arg7[%c8, %c0_16] : memref<37x256xf32, #tpu.memory_space<vmem>>, vector<4x256xf32>
    tpu.vector_store %arg7[%c8, %c0_16], %19 {strides = array<i32>} : memref<37x256xf32, #tpu.memory_space<vmem>>, vector<4x256xf32>,
    %c0_17 = arith.constant 0 : index
    %c127 = arith.constant 127 : index
    %21 = vector.load %arg6[%c0_17, %c127] : memref<4x512xf32, #tpu.memory_space<vmem>>, vector<4x256xf32>
    %22 = arith.mulf %21, %9 : vector<4x256xf32>
    %c12 = arith.constant 12 : index
    %c0_18 = arith.constant 0 : index
    %23 = vector.load %arg7[%c12, %c0_18] : memref<37x256xf32, #tpu.memory_space<vmem>>, vector<4x256xf32>
    tpu.vector_store %arg7[%c12, %c0_18], %22 {strides = array<i32>} : memref<37x256xf32, #tpu.memory_space<vmem>>, vector<4x256xf32>,
    %c0_19 = arith.constant 0 : index
    %c128_20 = arith.constant 128 : index
    %24 = vector.load %arg6[%c0_19, %c128_20] : memref<4x512xf32, #tpu.memory_space<vmem>>, vector<4x256xf32>
    %c16 = arith.constant 16 : index
    %c0_21 = arith.constant 0 : index
    %25 = vector.load %arg7[%c16, %c0_21] : memref<37x256xf32, #tpu.memory_space<vmem>>, vector<4x256xf32>
    tpu.vector_store %arg7[%c16, %c0_21], %24 {strides = array<i32>} : memref<37x256xf32, #tpu.memory_space<vmem>>, vector<4x256xf32>,
    %c0_22 = arith.constant 0 : index
    %c129 = arith.constant 129 : index
    %26 = vector.load %arg6[%c0_22, %c129] : memref<4x512xf32, #tpu.memory_space<vmem>>, vector<4x256xf32>
    %27 = arith.mulf %26, %12 : vector<4x256xf32>
    %c20 = arith.constant 20 : index
    %c0_23 = arith.constant 0 : index
    %28 = vector.load %arg7[%c20, %c0_23] : memref<37x256xf32, #tpu.memory_space<vmem>>, vector<4x256xf32>
    tpu.vector_store %arg7[%c20, %c0_23], %27 {strides = array<i32>} : memref<37x256xf32, #tpu.memory_space<vmem>>, vector<4x256xf32>,
    %c0_24 = arith.constant 0 : index
    %c143 = arith.constant 143 : index
    %29 = vector.load %arg6[%c0_24, %c143] : memref<4x512xf32, #tpu.memory_space<vmem>>, vector<4x256xf32>
    %30 = arith.mulf %29, %9 : vector<4x256xf32>
    %c24 = arith.constant 24 : index
    %c0_25 = arith.constant 0 : index
    %31 = vector.load %arg7[%c24, %c0_25] : memref<37x256xf32, #tpu.memory_space<vmem>>, vector<4x256xf32>
    tpu.vector_store %arg7[%c24, %c0_25], %30 {strides = array<i32>} : memref<37x256xf32, #tpu.memory_space<vmem>>, vector<4x256xf32>,
    %c0_26 = arith.constant 0 : index
    %c144 = arith.constant 144 : index
    %32 = vector.load %arg6[%c0_26, %c144] : memref<4x512xf32, #tpu.memory_space<vmem>>, vector<4x256xf32>
    %c28 = arith.constant 28 : index
    %c0_27 = arith.constant 0 : index
    %33 = vector.load %arg7[%c28, %c0_27] : memref<37x256xf32, #tpu.memory_space<vmem>>, vector<4x256xf32>
    tpu.vector_store %arg7[%c28, %c0_27], %32 {strides = array<i32>} : memref<37x256xf32, #tpu.memory_space<vmem>>, vector<4x256xf32>,
    %c0_28 = arith.constant 0 : index
    %c145 = arith.constant 145 : index
    %34 = vector.load %arg6[%c0_28, %c145] : memref<4x512xf32, #tpu.memory_space<vmem>>, vector<4x256xf32>
    %35 = arith.mulf %34, %12 : vector<4x256xf32>
    %c32 = arith.constant 32 : index
    %c0_29 = arith.constant 0 : index
    %36 = vector.load %arg7[%c32, %c0_29] : memref<37x256xf32, #tpu.memory_space<vmem>>, vector<4x256xf32>
    tpu.vector_store %arg7[%c32, %c0_29], %35 {strides = array<i32>} : memref<37x256xf32, #tpu.memory_space<vmem>>, vector<4x256xf32>,
    %cst_30 = arith.constant 1.000000e+00 : f32
    %37 = vector.broadcast %cst_30 : f32 to vector<1x256xf32>
    %c36 = arith.constant 36 : index
    %c0_31 = arith.constant 0 : index
    %38 = vector.load %arg7[%c36, %c0_31] : memref<37x256xf32, #tpu.memory_space<vmem>>, vector<1x256xf32>
    tpu.vector_store %arg7[%c36, %c0_31], %37 {strides = array<i32>} : memref<37x256xf32, #tpu.memory_space<vmem>>, vector<1x256xf32>,
    %c0_32 = arith.constant 0 : index
    %c0_33 = arith.constant 0 : index
    %39 = vector.load %arg4[%c0_32, %c0_33] : memref<8x37xf32, #tpu.memory_space<vmem>>, vector<8x37xf32>
    %c0_34 = arith.constant 0 : index
    %c0_35 = arith.constant 0 : index
    %40 = vector.load %arg7[%c0_34, %c0_35] : memref<37x256xf32, #tpu.memory_space<vmem>>, vector<37x256xf32>
    %cst_36 = arith.constant dense<0.000000e+00> : vector<8x256xf32>
    %41 = tpu.matmul %39, %40, %cst_36 {dimension_numbers = #tpu.dot_dimension_numbers<[1], [0], [0], [1], [0, 0, 1, 1], [], []>} : vector<8x37xf32>, vector<37x256xf32>, vector<8x256xf32> -> vector<8x256xf32>
    %cst_37 = arith.constant 0.000000e+00 : f32
    %42 = vector.broadcast %cst_37 : f32 to vector<8x256xf32>
    %43 = arith.cmpf oge, %41, %42 : vector<8x256xf32>
    %cst_38 = arith.constant 2.000000e-01 : f32
    %44 = vector.broadcast %cst_38 : f32 to vector<8x256xf32>
    %45 = arith.mulf %44, %41 : vector<8x256xf32>
    %46 = arith.select %43, %41, %45 : vector<8x256xi1>, vector<8x256xf32>
    %c0_39 = arith.constant 0 : index
    %c0_40 = arith.constant 0 : index
    %c0_41 = arith.constant 0 : index
    %47 = vector.load %arg5[%c0_39, %c0_40, %c0_41] : memref<1x8x256xf32, #tpu.memory_space<vmem>>, vector<1x8x256xf32>
    %48 = vector.shape_cast %47 : vector<1x8x256xf32> to vector<8x256xf32>
    %49 = vector.shape_cast %46 : vector<8x256xf32> to vector<1x8x256xf32>
    tpu.vector_store %arg5[%c0_39, %c0_40, %c0_41], %49 {strides = array<i32>} : memref<1x8x256xf32, #tpu.memory_space<vmem>>, vector<1x8x256xf32>,
    return
  }
  func.func @transform_0(%arg0: i32, %arg1: i32) -> (i32, i32, i32) {
    %c0_i32 = arith.constant 0 : i32
    %c0_i32_0 = arith.constant 0 : i32
    %c0_i32_1 = arith.constant 0 : i32
    return %arg0, %c0_i32, %c0_i32_0 : i32, i32, i32
  }
  func.func @transform_1(%arg0: i32, %arg1: i32) -> (i32, i32) {
    %c0_i32 = arith.constant 0 : i32
    %c0_i32_0 = arith.constant 0 : i32
    %c0_i32_1 = arith.constant 0 : i32
    return %c0_i32, %c0_i32_0 : i32, i32
  }
  func.func @transform_2(%arg0: i32, %arg1: i32) -> (i32, i32) {
    %c0_i32 = arith.constant 0 : i32
    %c0_i32_0 = arith.constant 0 : i32
    return %arg1, %c0_i32 : i32, i32
  }
  func.func @transform_3(%arg0: i32, %arg1: i32) -> (i32, i32, i32) {
    %c0_i32 = arith.constant 0 : i32
    %c0_i32_0 = arith.constant 0 : i32
    return %arg0, %arg1, %c0_i32 : i32, i32, i32
  }
}

</mosaic_0001>

<llo_original>
// kernel: tpu_custom_call.1
$region0: #{tpu_custom_call.1}
  #allocation0 [shape = 'u32[]', space=smem, size = 0x4, offset = 0x4, fixed_abs, tag = 'smem constant byte address 0x4 - core index']
  #allocation1 [shape = 'u32[144,128]{1,0:T(1,128)}', space=vmem, size = 0x12000, scoped, tag = 'internal scratch']
  #allocation2 [shape = 'f32[4,512]{1,0:T(4,128)}', space=vmem, size = 0x2000, scoped, tag = 'scratch operand']
  #allocation3 [shape = 'f32[37,256]{1,0:T(8,128)}', space=vmem, size = 0xa000, scoped, tag = 'scratch operand']
  %s0 = inlined_call_operand.hbm [shape: f32[2,4,256], index: 0, kind: input, shape index: {}]
  %s1 = inlined_call_operand.hbm [shape: f32[2,256], index: 1, kind: input, shape index: {}]
  %s2 = inlined_call_operand.hbm [shape: f32[8,37], index: 2, kind: input, shape index: {}]
  %s3 = inlined_call_operand.hbm [shape: f32[2,8,256], index: 3, kind: output, shape index: {}]
  %s4 = sld [smem:[#allocation0]]
  $region57: #{tpu_custom_call.1} parent=0
    _
  %s6 = ssub.s32 1, %s4
  %s7 = scalar_select 0, %s6, %s4
  $region1: #{tpu_custom_call.1} parent=0
    #allocation4 [shape = 'u8[8192]{0}', space=vmem, size = 0x2000, scoped, tag = 'input window, operand 0']
    #allocation5 [shape = 's32[2]{0}', space=sflag, size = 0x8, scoped, tag = 'scoped memory for tpu_custom_call.1']
    #allocation6 [shape = 's32[2]{0}', space=sflag, size = 0x8, scoped, tag = 'scoped memory for tpu_custom_call.1']
    #allocation7 [shape = 'u8[2048]{0}', space=vmem, size = 0x800, scoped, tag = 'input window, operand 1, single buffered']
    #allocation8 [shape = 's32[1]{0}', space=sflag, size = 0x4, scoped, tag = 'scoped memory for tpu_custom_call.1']
    #allocation9 [shape = 'u8[4096]{0}', space=vmem, size = 0x1000, scoped, tag = 'input window, operand 2, single buffered']
    #allocation10 [shape = 'u8[16384]{0}', space=vmem, size = 0x4000, scoped, tag = 'output window, operand 0']
    %8 = vsyncpa [#allocation5], 0
    %s9 = scalar_lea.sflag [#allocation5], 1
    %10 = vsyncpa %s9, 0
    %11 = vsyncpa [#allocation8], 0
    %12 = vsyncpa [#allocation6], 0
    %s13 = scalar_lea.sflag [#allocation6], 1
    %14 = vsyncpa %s13, 0
    loop: start=0, step=1, limit=4
    $region2: #{tpu_custom_call.1} parent=1 // loop_pre_header
      _
    $region3: #{tpu_custom_call.1} parent=1 // loop_header
      %s16 = sphi 0, %s20
      %p17 = scmp.ge.s32.totalorder %s16, 4
      %s23 = sphi 0, %s35
      %s24 = sphi 0, %s31
      %s25 = sphi 0, %s23
      %s26 = sphi 0, %s24
      %s27 = sphi 0, %s25
      %s28 = sphi 0, %s26
      %s38 = sphi 0, %s40
      %s41 = sphi 0, %s38
      %s42 = sphi 0, %s41
      %s58 = sphi 0, %s42
      %s62 = sphi 0, %s62
      %s64 = sphi 0, %s62
      %s65 = sphi 0, %s64
      %s79 = sphi 0, %s65
      %s85 = sphi 0, %s87
      %s88 = sphi 0, %s85
      %s89 = sphi 0, %s88
      %s105 = sphi 0, %s89
      %s113 = sphi 0, %s115
      %s116 = sphi 0, %s113
      %s117 = sphi 0, %s116
      %s133 = sphi 0, %s117
    $region4: #{tpu_custom_call.1} parent=1 // loop_header_branch
      %19 = sbr.rel (%p17) target = $region8
    $region5: #{tpu_custom_call.1} parent=1 // loop_body
      %s21 = ssub.s32 %s16, 1
      %s22 = ssub.s32 %s16, 2
      %s29 = sadd.s32 1, %s24
      %p30 = scmp.ge.s32.totalorder %s29, 1
      %s31 = scalar_select %p30, 0, %s29
      %s32 = sadd.s32 1, %s23
      %s33 = scalar_select %p30, %s32, %s23
      %p34 = scmp.ge.s32.totalorder %s33, 2
      %s35 = scalar_select %p34, 0, %s33
      %s36 = ssub.s32 %s23, %s35
      %p37 = scmp.eq.s32.totalorder %s36, 0
      %s39 = sadd.s32 %s38, 1
      %s40 = scalar_select %p37, %s38, %s39
      %p43 = pneg %p37
      %p44 = scmp.eq.s32.totalorder %s16, 1
      %p45 = por %p43, %p44
      %p46 = scmp.ne.s32.totalorder %s38, %s41
      %p47 = scmp.eq.s32.totalorder %s16, 0
      %p48 = por %p46, %p47
      %p49 = scmp.ne.s32.totalorder %s38, %s41
      %p50 = scmp.eq.s32.totalorder %s21, 1
      %p51 = por %p49, %p50
      %p52 = scmp.ne.s32.totalorder %s41, %s42
      %p53 = scmp.eq.s32.totalorder %s21, 0
      %p54 = por %p52, %p53
      %p55 = scmp.ne.s32.totalorder %s41, %s42
      %p56 = scmp.eq.s32.totalorder %s22, 1
      %p57 = por %p55, %p56
      %p59 = scmp.ne.s32.totalorder %s42, %s58
      %p60 = scmp.eq.s32.totalorder %s22, 0
      %p61 = por %p59, %p60
      %s63 = sadd.s32 %s62, 1
      %p66 = scmp.eq.s32.totalorder %s16, 1
      %p67 = scmp.ne.s32.totalorder %s62, %s64
      %p68 = scmp.eq.s32.totalorder %s16, 0
      %p69 = por %p67, %p68
      %p70 = scmp.ne.s32.totalorder %s62, %s64
      %p71 = scmp.eq.s32.totalorder %s21, 1
      %p72 = por %p70, %p71
      %p73 = scmp.ne.s32.totalorder %s64, %s65
      %p74 = scmp.eq.s32.totalorder %s21, 0
      %p75 = por %p73, %p74
      %p76 = scmp.ne.s32.totalorder %s64, %s65
      %p77 = scmp.eq.s32.totalorder %s22, 1
      %p78 = por %p76, %p77
      %p80 = scmp.ne.s32.totalorder %s65, %s79
      %p81 = scmp.eq.s32.totalorder %s22, 0
      %p82 = por %p80, %p81
      %s83 = ssub.s32 %s24, %s31
      %p84 = scmp.eq.s32.totalorder %s83, 0
      %s86 = sadd.s32 %s85, 1
      %s87 = scalar_select %p84, %s85, %s86
      %p90 = pneg %p84
      %p91 = scmp.eq.s32.totalorder %s16, 1
      %p92 = por %p90, %p91
      %p93 = scmp.ne.s32.totalorder %s85, %s88
      %p94 = scmp.eq.s32.totalorder %s16, 0
      %p95 = por %p93, %p94
      %p96 = scmp.ne.s32.totalorder %s85, %s88
      %p97 = scmp.eq.s32.totalorder %s21, 1
      %p98 = por %p96, %p97
      %p99 = scmp.ne.s32.totalorder %s88, %s89
      %p100 = scmp.eq.s32.totalorder %s21, 0
      %p101 = por %p99, %p100
      %p102 = scmp.ne.s32.totalorder %s88, %s89
      %p103 = scmp.eq.s32.totalorder %s22, 1
      %p104 = por %p102, %p103
      %p106 = scmp.ne.s32.totalorder %s89, %s105
      %p107 = scmp.eq.s32.totalorder %s22, 0
      %p108 = por %p106, %p107
      %s109 = ssub.s32 %s23, %s35
      %s110 = ssub.s32 %s24, %s31
      %s111 = sor.u32 %s109, %s110
      %p112 = scmp.eq.s32.totalorder %s111, 0
      %s114 = sadd.s32 %s113, 1
      %s115 = scalar_select %p112, %s113, %s114
      %p118 = pneg %p112
      %p119 = scmp.eq.s32.totalorder %s16, 1
      %p120 = por %p118, %p119
      %p121 = scmp.ne.s32.totalorder %s113, %s116
      %p122 = scmp.eq.s32.totalorder %s16, 0
      %p123 = por %p121, %p122
      %p124 = scmp.ne.s32.totalorder %s113, %s116
      %p125 = scmp.eq.s32.totalorder %s21, 1
      %p126 = por %p124, %p125
      %p127 = scmp.ne.s32.totalorder %s116, %s117
      %p128 = scmp.eq.s32.totalorder %s21, 0
      %p129 = por %p127, %p128
      %p130 = scmp.ne.s32.totalorder %s116, %s117
      %p131 = scmp.eq.s32.totalorder %s22, 1
      %p132 = por %p130, %p131
      %p134 = scmp.ne.s32.totalorder %s117, %s133
      %p135 = scmp.eq.s32.totalorder %s22, 0
      %p136 = por %p134, %p135
      %p137 = scmp.le.s32.totalorder 1, %s16
      %p138 = scmp.lt.s32.totalorder %s16, 3
      %p139 = pnand %p137, %p138
      %p140 = pneg %p139
      // Predicated region
      $region9: #{tpu_custom_call.1} parent=5 // pred_check
        _
      $region10: #{tpu_custom_call.1} parent=5 // pred_check_branch
        %142 = sbr.rel (%p139) target = $region12
      $region11: #{tpu_custom_call.1} parent=5 // pred_region
        %s143 = ssub.s32 %s16, 1
        // Predicated region
        $region13: #{tpu_custom_call.1} parent=11 // pred_check
          %p144 = pneg %p75
        $region14: #{tpu_custom_call.1} parent=11 // pred_check_branch
          %146 = sbr.rel (%p144) target = $region16
        $region15: #{tpu_custom_call.1} parent=11 // pred_region
          %s148 = ssub.s32 64, 64
          %149 = vsyncadd [#allocation8], %s148
          %s151 = sshll.u32 [#allocation7], 4
          %s152 = int_to_ptr.vmem [resolvable:$true] %s151
          %154 = dma.hbm_to_vmem [thread:$0]  %s1, 64, %s152, [#allocation8]
        $region16: #{tpu_custom_call.1} parent=11 // pred_fallthru
          _
        // Predicated region
        $region17: #{tpu_custom_call.1} parent=11 // pred_check
          %p155 = pneg %p101
        $region18: #{tpu_custom_call.1} parent=11 // pred_check_branch
          %157 = sbr.rel (%p155) target = $region20
        $region19: #{tpu_custom_call.1} parent=11 // pred_region
          %s159 = ssub.s32 128, 128
          %160 = vsyncadd [#allocation8], %s159
          %s161 = smul.addr %s26, 128
          %s162 = scalar_lea.hbm %s2, %s161
          %s164 = sshll.u32 [#allocation9], 4
          %s165 = int_to_ptr.vmem [resolvable:$true] %s164
          %167 = dma.hbm_to_vmem [thread:$0]  %s162, 128, %s165, [#allocation8]
        $region20: #{tpu_custom_call.1} parent=11 // pred_fallthru
          _
      $region12: #{tpu_custom_call.1} parent=5 // pred_fallthru
        _
      %p168 = scmp.lt.s32.totalorder %s16, 2
      // Predicated region
      $region21: #{tpu_custom_call.1} parent=5 // pred_check
        %p169 = pneg %p168
      $region22: #{tpu_custom_call.1} parent=5 // pred_check_branch
        %171 = sbr.rel (%p169) target = $region24
      $region23: #{tpu_custom_call.1} parent=5 // pred_region
        // Predicated region
        $region25: #{tpu_custom_call.1} parent=23 // pred_check
          %p172 = pneg %p48
        $region26: #{tpu_custom_call.1} parent=23 // pred_check_branch
          %174 = sbr.rel (%p172) target = $region28
        $region27: #{tpu_custom_call.1} parent=23 // pred_region
          %s175 = sand.u32 %s38, 1
          %s176 = scalar_lea.sflag [#allocation5], %s175
          %s177 = sand.u32 %s38, 1
          %s178 = smul.addr %s177, 8
          %s179 = scalar_lea.vmem [#allocation4], %s178
          %s181 = ssub.s32 128, 128
          %182 = vsyncadd %s176, %s181
          %s183 = smul.addr %s23, 2
          %s184 = smul.addr %s183, 64
          %s185 = scalar_lea.hbm %s0, %s184
          %s187 = sshll.u32 %s179, 4
          %s188 = int_to_ptr.vmem [resolvable:$true] %s187
          %190 = dma.hbm_to_vmem [thread:$0]  %s185, 128, %s188, %s176
        $region28: #{tpu_custom_call.1} parent=23 // pred_fallthru
          _
      $region24: #{tpu_custom_call.1} parent=5 // pred_fallthru
        _
      %p191 = scmp.le.s32.totalorder 1, %s16
      %p192 = scmp.lt.s32.totalorder %s16, 3
      %p193 = pnand %p191, %p192
      %p194 = pneg %p193
      // Predicated region
      $region29: #{tpu_custom_call.1} parent=5 // pred_check
        _
      $region30: #{tpu_custom_call.1} parent=5 // pred_check_branch
        %196 = sbr.rel (%p193) target = $region32
      $region31: #{tpu_custom_call.1} parent=5 // pred_region
        %s197 = ssub.s32 %s16, 1
        %s198 = sand.u32 %s41, 1
        %s199 = scalar_lea.sflag [#allocation5], %s198
        %s200 = sand.u32 %s41, 1
        %s201 = smul.addr %s200, 8
        %s202 = scalar_lea.vmem [#allocation4], %s201
        // Predicated region
        $region33: #{tpu_custom_call.1} parent=31 // pred_check
          %p203 = pneg %p54
        $region34: #{tpu_custom_call.1} parent=31 // pred_check_branch
          %205 = sbr.rel (%p203) target = $region36
        $region35: #{tpu_custom_call.1} parent=31 // pred_region
          %206 = dma.done %s199, 128
        $region36: #{tpu_custom_call.1} parent=31 // pred_fallthru
          _
        // Predicated region
        $region37: #{tpu_custom_call.1} parent=31 // pred_check
          %p207 = pneg %p75
        $region38: #{tpu_custom_call.1} parent=31 // pred_check_branch
          %209 = sbr.rel (%p207) target = $region40
        $region39: #{tpu_custom_call.1} parent=31 // pred_region
          %210 = dma.done [#allocation8], 64
        $region40: #{tpu_custom_call.1} parent=31 // pred_fallthru
          _
        // Predicated region
        $region41: #{tpu_custom_call.1} parent=31 // pred_check
          %p211 = pneg %p101
        $region42: #{tpu_custom_call.1} parent=31 // pred_check_branch
          %213 = sbr.rel (%p211) target = $region44
        $region43: #{tpu_custom_call.1} parent=31 // pred_region
          %214 = dma.done [#allocation8], 128
        $region44: #{tpu_custom_call.1} parent=31 // pred_fallthru
          _
        %s215 = sand.u32 %s41, 1
        %s216 = scalar_lea.sflag [#allocation5], %s215
        %s217 = sand.u32 %s41, 1
        %s218 = smul.addr %s217, 8
        %s219 = scalar_lea.vmem [#allocation4], %s218
        %p220 = pneg %p54
        %p221 = pneg %p51
        %p222 = pneg %p75
        %p223 = pneg %p72
        %p224 = pneg %p101
        %p225 = pneg %p98
        %p226 = pneg %p129
        %p227 = pneg %p126
        %s228 = sand.u32 %s116, 1
        %s229 = scalar_lea.sflag [#allocation6], %s228
        %s230 = sand.u32 %s116, 1
        %s231 = smul.addr %s230, 16
        %s232 = scalar_lea.vmem [#allocation10], %s231
        %233 = vst [vmem:[#allocation2] sm:$0xf] 0.0
        %234 = vst [vmem:[#allocation2 + $0xc] sm:$0xf] 0.0
        %v235 = vld [vmem:[%s202] sm:$0xff]
        %236 = vst [vmem:[#allocation2 + $0x4] sm:$0xff] %v235
        %v237 = vld [vmem:[#allocation7] ss:$2 sm:$0x3]
        %v239 = vlaneseq
        %v240 = vshrl.u32 %v239, 7
        %v241 = vsub.s32 0, %v240
        %v242 = vrot.slane %v237, %v241
        %v243 = vlaneseq
        %v244 = vshrl.u32 %v243, 7
        %v245 = vsub.s32 1, %v244
        %v246 = vrot.slane %v237, %v245
        %s247 = scalar_lea.vmem [#allocation7], 1
        %v248 = vld [vmem:[%s247] ss:$2 sm:$0x3]
        %v250 = vlaneseq
        %v251 = vshrl.u32 %v250, 7
        %v252 = vsub.s32 0, %v251
        %v253 = vrot.slane %v248, %v252
        %v254 = vlaneseq
        %v255 = vshrl.u32 %v254, 7
        %v256 = vsub.s32 1, %v255
        %v257 = vrot.slane %v248, %v256
        %v258 = vld [vmem:[#allocation2] sm:$0xff]
        %v259 = vld [vmem:[#allocation2 + $0x8] sm:$0xf]
        %v260 = vcombine.low %v242, %v246
        %261 = vrot.lane.b32.xlu0 %v260, 111
        %v262 = vpop.permute.xlu0 %261
        %v263 = vrot.slane %v262, 4
        %vm264 = vcmask 908288
        %v265 = vsel %vm264, %v263, %v262
        %v268 = vmul.f32 %v258, %v265
        %v269 = vmul.f32 %v259, %v263
        %v272 = vcombine.high %v268, %v268
        %273 = vrot.lane.b32.xlu0 %v268, 17
        %v274 = vpop.permute.xlu0 %273
        %275 = vrot.lane.b32.xlu0 %v272, 17
        %v276 = vpop.permute.xlu0 %275
        %277 = vrot.lane.b32.xlu0 %v269, 17
        %v278 = vpop.permute.xlu0 %277
        %vm279 = vcmask 138240
        %v280 = vsel %vm279, %v274, %v276
        %v281 = vsel %vm279, %v276, %v278
        %284 = vst [vmem:[#allocation3] sm:$0xf] %v280
        %285 = vst [vmem:[#allocation3 + $0x8] sm:$0xf] %v281
        %v286 = vld [vmem:[#allocation2] sm:$0xff]
        %v287 = vld [vmem:[#allocation2 + $0x8] sm:$0xf]
        %v290 = vcombine.low %v286, %v286
        %v291 = vcombine.low %v287, %v287
        %292 = vrot.lane.b32.xlu0 %v290, 16
        %v293 = vpop.permute.xlu0 %292
        %294 = vrot.lane.b32.xlu0 %v286, 16
        %v295 = vpop.permute.xlu0 %294
        %296 = vrot.lane.b32.xlu0 %v291, 16
        %v297 = vpop.permute.xlu0 %296
        %vm298 = vcmask 130048
        %v299 = vsel %vm298, %v293, %v295
        %v300 = vsel %vm298, %v295, %v297
        %303 = vst [vmem:[#allocation3] sm:$0xf0] %v299
        %304 = vst [vmem:[#allocation3 + $0x8] sm:$0xf0] %v300
        %v305 = vld [vmem:[#allocation2] sm:$0xff]
        %v306 = vld [vmem:[#allocation2 + $0x8] sm:$0xf]
        %v307 = vcombine.low %v253, %v257
        %308 = vrot.lane.b32.xlu0 %v307, 113
        %v309 = vpop.permute.xlu0 %308
        %v310 = vrot.slane %v309, 4
        %vm311 = vcmask 924672
        %v312 = vsel %vm311, %v310, %v309
        %v315 = vmul.f32 %v305, %v312
        %v316 = vmul.f32 %v306, %v310
        %v319 = vcombine.high %v315, %v315
        %320 = vrot.lane.b32.xlu0 %v315, 15
        %v321 = vpop.permute.xlu0 %320
        %322 = vrot.lane.b32.xlu0 %v319, 15
        %v323 = vpop.permute.xlu0 %322
        %324 = vrot.lane.b32.xlu0 %v316, 15
        %v325 = vpop.permute.xlu0 %324
        %vm326 = vcmask 121856
        %v327 = vsel %vm326, %v321, %v323
        %v328 = vsel %vm326, %v323, %v325
        %331 = vst [vmem:[#allocation3 + $0x10] sm:$0xf] %v327
        %332 = vst [vmem:[#allocation3 + $0x18] sm:$0xf] %v328
        %v333 = vld [vmem:[#allocation2] sm:$0xff]
        %v334 = vld [vmem:[#allocation2 + $0x8] sm:$0xf]
        %335 = vrot.lane.b32.xlu0 %v260, 127
        %v336 = vpop.permute.xlu0 %335
        %v337 = vrot.slane %v336, 4
        %vm338 = vcmask 1039360
        %v339 = vsel %vm338, %v337, %v336
        %v342 = vmul.f32 %v333, %v339
        %v343 = vmul.f32 %v334, %v337
        %v346 = vcombine.low %v342, %v342
        %v347 = vcombine.low %v343, %v343
        %348 = vrot.lane.b32.xlu0 %v346, 1
        %v349 = vpop.permute.xlu0 %348
        %350 = vrot.lane.b32.xlu0 %v342, 1
        %v351 = vpop.permute.xlu0 %350
        %352 = vrot.lane.b32.xlu0 %v347, 1
        %v353 = vpop.permute.xlu0 %352
        %vm354 = vcmask 7168
        %v355 = vsel %vm354, %v349, %v351
        %v356 = vsel %vm354, %v351, %v353
        %359 = vst [vmem:[#allocation3 + $0x10] sm:$0xf0] %v355
        %360 = vst [vmem:[#allocation3 + $0x18] sm:$0xf0] %v356
        %v361 = vld [vmem:[#allocation2 + $0x4] sm:$0xff]
        %v363 = vcombine.high %v361, %v361
        %365 = vst [vmem:[#allocation3 + $0x20] sm:$0xf] %v361
        %366 = vst [vmem:[#allocation3 + $0x28] sm:$0xf] %v363
        %v367 = vld [vmem:[#allocation2 + $0x4] sm:$0xff]
        %v368 = vld [vmem:[#allocation2 + $0xc] sm:$0xf]
        %369 = vrot.lane.b32.xlu0 %v307, 1
        %v370 = vpop.permute.xlu0 %369
        %v371 = vrot.slane %v370, 4
        %v372 = vsel %vm354, %v371, %v370
        %v375 = vmul.f32 %v367, %v372
        %v376 = vmul.f32 %v368, %v371
        %v379 = vcombine.low %v375, %v375
        %v380 = vcombine.low %v376, %v376
        %381 = vrot.lane.b32.xlu0 %v379, 127
        %v382 = vpop.permute.xlu0 %381
        %383 = vrot.lane.b32.xlu0 %v375, 127
        %v384 = vpop.permute.xlu0 %383
        %385 = vrot.lane.b32.xlu0 %v380, 127
        %v386 = vpop.permute.xlu0 %385
        %v387 = vsel %vm338, %v382, %v384
        %v388 = vsel %vm338, %v384, %v386
        %391 = vst [vmem:[#allocation3 + $0x20] sm:$0xf0] %v387
        %392 = vst [vmem:[#allocation3 + $0x28] sm:$0xf0] %v388
        %v393 = vld [vmem:[#allocation2 + $0x4] sm:$0xff]
        %v394 = vld [vmem:[#allocation2 + $0xc] sm:$0xf]
        %395 = vrot.lane.b32.xlu0 %v260, 15
        %v396 = vpop.permute.xlu0 %395
        %v397 = vrot.slane %v396, 4
        %v398 = vsel %vm326, %v397, %v396
        %v401 = vmul.f32 %v393, %v398
        %v402 = vmul.f32 %v394, %v397
        %v405 = vcombine.high %v401, %v401
        %406 = vrot.lane.b32.xlu0 %v401, 113
        %v407 = vpop.permute.xlu0 %406
        %408 = vrot.lane.b32.xlu0 %v405, 113
        %v409 = vpop.permute.xlu0 %408
        %410 = vrot.lane.b32.xlu0 %v402, 113
        %v411 = vpop.permute.xlu0 %410
        %v412 = vsel %vm311, %v407, %v409
        %v413 = vsel %vm311, %v409, %v411
        %416 = vst [vmem:[#allocation3 + $0x30] sm:$0xf] %v412
        %417 = vst [vmem:[#allocation3 + $0x38] sm:$0xf] %v413
        %v418 = vld [vmem:[#allocation2 + $0x4] sm:$0xff]
        %v419 = vld [vmem:[#allocation2 + $0xc] sm:$0xf]
        %v422 = vcombine.low %v418, %v418
        %v423 = vcombine.low %v419, %v419
        %424 = vrot.lane.b32.xlu0 %v422, 112
        %v425 = vpop.permute.xlu0 %424
        %426 = vrot.lane.b32.xlu0 %v418, 112
        %v427 = vpop.permute.xlu0 %426
        %428 = vrot.lane.b32.xlu0 %v423, 112
        %v429 = vpop.permute.xlu0 %428
        %vm430 = vcmask 916480
        %v431 = vsel %vm430, %v425, %v427
        %v432 = vsel %vm430, %v427, %v429
        %435 = vst [vmem:[#allocation3 + $0x30] sm:$0xf0] %v431
        %436 = vst [vmem:[#allocation3 + $0x38] sm:$0xf0] %v432
        %v437 = vld [vmem:[#allocation2 + $0x4] sm:$0xff]
        %v438 = vld [vmem:[#allocation2 + $0xc] sm:$0xf]
        %439 = vrot.lane.b32.xlu0 %v307, 17
        %v440 = vpop.permute.xlu0 %439
        %v441 = vrot.slane %v440, 4
        %v442 = vsel %vm279, %v441, %v440
        %v445 = vmul.f32 %v437, %v442
        %v446 = vmul.f32 %v438, %v441
        %v449 = vcombine.high %v445, %v445
        %450 = vrot.lane.b32.xlu0 %v445, 111
        %v451 = vpop.permute.xlu0 %450
        %452 = vrot.lane.b32.xlu0 %v449, 111
        %v453 = vpop.permute.xlu0 %452
        %454 = vrot.lane.b32.xlu0 %v446, 111
        %v455 = vpop.permute.xlu0 %454
        %v456 = vsel %vm264, %v451, %v453
        %v457 = vsel %vm264, %v453, %v455
        %460 = vst [vmem:[#allocation3 + $0x40] sm:$0xf] %v456
        %461 = vst [vmem:[#allocation3 + $0x48] sm:$0xf] %v457
        %v462 = vlaneseq
        %vm463 = vcmp.ge.s32.totalorder %v462, 0
        %vm464 = vcmp.lt.s32.totalorder %v462, 256
        %vm465 = vmand %vm463, %vm464
        %s466 = scalar_lea.vmem [#allocation3], 68
        %467 = vst.msk [vmem:[%s466] ss:$8 sm:$0x3] %vm465, 1.0
        %468 = vst.msk [vmem:[%s466] ss:$8 sm:$0x0] %vm465, 1.0
        %v469 = vld [vmem:[#allocation9] sm:$0xff]
        %v470 = vld [vmem:[#allocation3] sm:$0xff]
        %v471 = vld [vmem:[#allocation3 + $0x8] sm:$0xff]
        %v472 = vld [vmem:[#allocation3 + $0x10] sm:$0xff]
        %v473 = vld [vmem:[#allocation3 + $0x18] sm:$0xff]
        %v474 = vld [vmem:[#allocation3 + $0x20] sm:$0xff]
        %v475 = vld [vmem:[#allocation3 + $0x28] sm:$0xff]
        %v476 = vld [vmem:[#allocation3 + $0x30] sm:$0xff]
        %v477 = vld [vmem:[#allocation3 + $0x38] sm:$0xff]
        %v478 = vld [vmem:[#allocation3 + $0x40] sm:$0x1f]
        %v479 = vld [vmem:[#allocation3 + $0x48] sm:$0x1f]
        %vm480 = vcmask 302080
        %v482 = vsel %vm480, %v469, 0
        %vm484 = vcmask 1044480
        %v486 = vsel %vm484, %v478, 0
        %v489 = vsel %vm484, %v479, 0
        %491 = vmatprep.subr.mxu0 %v471
        %492 = vmatpush1.msra.mxu0 %v470
        %493 = vmatprep.subr.mxu0 %v473
        %494 = vmatpush1.msra.mxu0 %v472
        %495 = vmatprep.subr.mxu0 %v475
        %496 = vmatpush1.msra.mxu0 %v474
        %497 = vmatprep.subr.mxu0 %v477
        %498 = vmatpush1.msra.mxu0 %v476
        %499 = vmatprep.subr.mxu0 %v489
        %500 = vmatpush1.msra.mxu0 %v486
        %501 = vmatprep.subr.mxu0 0.0
        %502 = vmatpush1.msra.mxu0 0.0
        %503 = vmatprep.subr.mxu0 0.0
        %504 = vmatpush1.msra.mxu0 0.0
        %505 = vmatprep.subr.mxu0 0.0
        %506 = vmatpush1.msra.mxu0 0.0
        %507 = vmatprep.subr.mxu0 0.0
        %508 = vmatpush1.msra.mxu0 0.0
        %509 = vmatprep.subr.mxu0 0.0
        %510 = vmatpush1.msra.mxu0 0.0
        %511 = vmatprep.subr.mxu0 0.0
        %512 = vmatpush1.msra.mxu0 0.0
        %513 = vmatprep.subr.mxu0 0.0
        %514 = vmatpush1.msra.mxu0 0.0
        %515 = vmatprep.subr.mxu0 0.0
        %516 = vmatpush1.msra.mxu0 0.0
        %517 = vmatprep.subr.mxu0 0.0
        %518 = vmatpush1.msra.mxu0 0.0
        %519 = vmatprep.subr.mxu0 0.0
        %520 = vmatpush1.msra.mxu0 0.0
        %521 = vmatprep.subr.mxu0 0.0
        %522 = vmatpush1.msra.mxu0 0.0
        %523 = vmatprep.subr.mxu0 0.0
        %524 = vmatpush1.msra.mxu0 0.0
        %525 = vmatprep.subr.mxu0 0.0
        %526 = vmatpush1.msra.mxu0 0.0
        %527 = vmatprep.subr.mxu0 0.0
        %528 = vmatpush1.msra.mxu0 0.0
        %529 = vmatprep.subr.mxu0 0.0
        %530 = vmatpush1.msra.mxu0 0.0
        %531 = vmatprep.subr.mxu0 0.0
        %532 = vmatpush1.msra.mxu0 0.0
        %533 = vmatprep.subr.mxu0 0.0
        %534 = vmatpush1.msra.mxu0 0.0
        %535 = vmatprep.subr.mxu0 0.0
        %536 = vmatpush1.msra.mxu0 0.0
        %537 = vmatprep.subr.mxu0 0.0
        %538 = vmatpush1.msra.mxu0 0.0
        %539 = vmatprep.subr.mxu0 0.0
        %540 = vmatpush1.msra.mxu0 0.0
        %541 = vmatprep.subr.mxu0 0.0
        %542 = vmatpush1.msra.mxu0 0.0
        %543 = vmatprep.subr.mxu0 0.0
        %544 = vmatpush1.msra.mxu0 0.0
        %545 = vmatprep.subr.mxu0 0.0
        %546 = vmatpush1.msra.mxu0 0.0
        %547 = vmatprep.subr.mxu0 0.0
        %548 = vmatpush1.msra.mxu0 0.0
        %549 = vmatprep.subr.mxu0 0.0
        %550 = vmatpush1.msra.mxu0 0.0
        %551 = vmatprep.subr.mxu0 0.0
        %552 = vmatpush1.msra.mxu0 0.0
        %553 = vmatprep.subr.mxu0 0.0
        %554 = vmatpush1.msra.mxu0 0.0
        %555 = vmatprep.mubr.f32.mxu0 0.0
        %556 = vmatmul.mubr.f32.gmra.mrb[0].mxu0 %v482
        %v557 = vpop.f32.mrb[0].mxu0
        %v558 = vadd.f32 0.0, %v557
        %v559 = vpop.f32.mrb[0].mxu0
        %v560 = vadd.f32 0.0, %v559
        %561 = vdwg.mxu0
        %vm562 = vcmp.ge.f32.partialorder %v558, 0.0
        %vm563 = vcmp.ge.f32.partialorder %v560, 0.0
        %v564 = vmul.f32 %v558, 0.2
        %v565 = vmul.f32 %v560, 0.2
        %v566 = vsel %vm562, %v558, %v564
        %v567 = vsel %vm563, %v560, %v565
        %568 = vst [vmem:[%s232] sm:$0xff] %v566
        %569 = vst [vmem:[%s232 + $0x8] sm:$0xff] %v567
        %s570 = sand.u32 %s116, 1
        %s571 = scalar_lea.sflag [#allocation6], %s570
        %s572 = sand.u32 %s116, 1
        %s573 = smul.addr %s572, 16
        %s574 = scalar_lea.vmem [#allocation10], %s573
        // Predicated region
        $region45: #{tpu_custom_call.1} parent=31 // pred_check
          %p575 = pneg %p126
        $region46: #{tpu_custom_call.1} parent=31 // pred_check_branch
          %577 = sbr.rel (%p575) target = $region48
        $region47: #{tpu_custom_call.1} parent=31 // pred_region
          %s579 = ssub.s32 256, 256
          %580 = vsyncadd %s571, %s579
          %s581 = smul.addr %s26, 2
          %s582 = smul.addr %s25, 2
          %s583 = sadd.s32 %s581, %s582
          %s584 = smul.addr %s583, 128
          %s585 = scalar_lea.hbm %s3, %s584
          %s587 = sshll.u32 %s574, 4
          %s588 = int_to_ptr.vmem [resolvable:$true] %s587
          %590 = dma.vmem_to_hbm [thread:$0]  %s588, 256, %s585, %s571
        $region48: #{tpu_custom_call.1} parent=31 // pred_fallthru
          _
      $region32: #{tpu_custom_call.1} parent=5 // pred_fallthru
        _
      %p591 = scmp.le.s32.totalorder 2, %s16
      // Predicated region
      $region49: #{tpu_custom_call.1} parent=5 // pred_check
        %p592 = pneg %p591
      $region50: #{tpu_custom_call.1} parent=5 // pred_check_branch
        %594 = sbr.rel (%p592) target = $region52
      $region51: #{tpu_custom_call.1} parent=5 // pred_region
        %s595 = ssub.s32 %s16, 2
        // Predicated region
        $region53: #{tpu_custom_call.1} parent=51 // pred_check
          %p596 = pneg %p132
        $region54: #{tpu_custom_call.1} parent=51 // pred_check_branch
          %598 = sbr.rel (%p596) target = $region56
        $region55: #{tpu_custom_call.1} parent=51 // pred_region
          %s599 = sand.u32 %s117, 1
          %s600 = scalar_lea.sflag [#allocation6], %s599
          %s601 = sand.u32 %s117, 1
          %s602 = smul.addr %s601, 16
          %s603 = scalar_lea.vmem [#allocation10], %s602
          %604 = dma.done %s600, 256
        $region56: #{tpu_custom_call.1} parent=51 // pred_fallthru
          _
      $region52: #{tpu_custom_call.1} parent=5 // pred_fallthru
        _
    $region6: #{tpu_custom_call.1} parent=1 // loop_footer
      %s20 = sadd.s32 1, %s16
    $region7: #{tpu_custom_call.1} parent=1 // loop_footer_branch
      %15 = sbr.rel target = $region3
    $region8: #{tpu_custom_call.1} parent=1 // loop_exit
      _
    %605 = vsyncpa [#allocation5], 1
    %s606 = scalar_lea.sflag [#allocation5], 1
    %607 = vsyncpa %s606, 1
    %608 = vsyncpa [#allocation8], 1
    %609 = vsyncpa [#allocation6], 1
    %s610 = scalar_lea.sflag [#allocation6], 1
    %611 = vsyncpa %s610, 1

</llo_original>
